<compile_context>
chip_gen: v6e
topology: v6e:2x2x1
jax: 0.10.0
libtpu: 0.0.40
codegen_flags: <defaults>
</compile_context>

<pallas_src>
import functools

import jax
import jax.numpy as jnp
from jax.experimental import pallas as pl
from jax.experimental.pallas import tpu as pltpu

_MIB = 1024 * 1024
_TARGET_BLOCK_BYTES = 2 * _MIB     # per-input-block target (amortizes step overhead)
_VMEM_CAP_BYTES = 30 * _MIB        # safe on v5e/v6e (128 MiB) and v7x (64 MiB)


def _round_up(v, m):
    return (v + m - 1) // m * m


def _adain_kernel(x_ref, w_ref, b_ref, o_ref, *, eps):
    # x_ref / o_ref: (tile_r, HW) block.  w_ref / b_ref: (tile_r, 1) f32 blocks.
    x = x_ref[...].astype(jnp.float32)
    mean = jnp.mean(x, axis=-1, keepdims=True)
    centered = x - mean
    var = jnp.mean(centered * centered, axis=-1, keepdims=True)  # biased (training mode)
    inv_std = jax.lax.rsqrt(var + eps)

    gamma = (w_ref[...] + 1.0) * inv_std        # (tile_r, 1)
    beta = b_ref[...]                           # (tile_r, 1)
    o_ref[...] = (centered * gamma + beta).astype(o_ref.dtype)


def adaptive_instance_norm_2d(x, weight, bias, *, eps=1e-5):
    """AdaIN forward.

    Args:
      x: (B, C, H, W) array (NCHW, matching PyTorch).
      weight: (B*C,) array (module's self.weight; effective gamma = weight + 1).
      bias:   (B*C,) array (module's self.bias; effective beta).
      eps: numerical epsilon.

    Returns:
      (B, C, H, W) array, same dtype as x.
    """
    b, c, h, w = x.shape
    bc = b * c
    hw = h * w
    itemsize = jnp.dtype(x.dtype).itemsize

    # Sublane granularity: 8 rows for 4-byte dtypes, 16 for bf16, 32 for int8.
    g = max(8, 32 // itemsize)

    # Row tile from the ~2 MiB block target ...
    bytes_per_row = max(1, hw * itemsize)
    tile_r = max(g, (_TARGET_BLOCK_BYTES // bytes_per_row) // g * g)

    # ... clamped to the VMEM budget: double-buffered input + output blocks in
    # the native dtype plus two f32 compute temporaries (cast x, centered).
    per_row_resident = 4 * bytes_per_row + 2 * hw * 4
    budget_rows = max(0, _VMEM_CAP_BYTES - 2 * _MIB) // per_row_resident
    tile_r = min(tile_r, max(g, (budget_rows // g) * g))
    # TODO(synk): if hw is so large that even a g-row block exceeds the VMEM
    # budget, a blocked-hw (two-pass sum / sum-of-squares) reduction would be
    # needed; not implemented here.

    bc_pad_min = _round_up(bc, g)
    if tile_r >= bc_pad_min:
        # Whole problem fits in one block: split into two tiles when possible
        # so the "parallel" grid axis can shard across v7x's two TensorCores.
        if bc_pad_min >= 2 * g:
            tile_r = _round_up((bc_pad_min + 1) // 2, g)
        else:
            tile_r = bc_pad_min

    bc_pad = _round_up(bc, tile_r)
    grid = (bc_pad // tile_r,)

    x2d = x.reshape(bc, hw)
    w2d = weight.reshape(bc, 1).astype(jnp.float32)
    b2d = bias.reshape(bc, 1).astype(jnp.float32)
    pad = bc_pad - bc
    if pad:
        # Zero-pad rows to keep the aligned tiled fast path; padded rows give
        # mean=0, centered=0 (finite outputs) and are sliced off below.
        x2d = jnp.pad(x2d, ((0, pad), (0, 0)))
        w2d = jnp.pad(w2d, ((0, pad), (0, 0)))
        b2d = jnp.pad(b2d, ((0, pad), (0, 0)))

    x_block_bytes = tile_r * bytes_per_row
    f32_block_bytes = tile_r * hw * 4
    vmem_limit = int(min(
        _VMEM_CAP_BYTES,
        max(16 * _MIB,
            4 * x_block_bytes + 2 * f32_block_bytes + 4 * tile_r * 128 * 4 + 2 * _MIB),
    ))

    out2d = pl.pallas_call(
        functools.partial(_adain_kernel, eps=eps),
        out_shape=jax.ShapeDtypeStruct((bc_pad, hw), x.dtype),
        grid=grid,
        in_specs=[
            pl.BlockSpec((tile_r, hw), lambda i: (i, 0)),
            pl.BlockSpec((tile_r, 1), lambda i: (i, 0)),
            pl.BlockSpec((tile_r, 1), lambda i: (i, 0)),
        ],
        out_specs=pl.BlockSpec((tile_r, hw), lambda i: (i, 0)),
        compiler_params=pltpu.CompilerParams(
            dimension_semantics=("parallel",),
            vmem_limit_bytes=vmem_limit,
        ),
    )(x2d, w2d, b2d)

    if pad:
        out2d = out2d[:bc]
    return out2d.reshape(b, c, h, w)


def _reference_adain(x, weight, bias, eps=1e-5):
    """Pure-JAX reference mirroring F.batch_norm(training=True) on the view."""
    b, c, h, w = x.shape
    xr = x.reshape(b * c, h * w).astype(jnp.float32)
    mean = xr.mean(axis=-1, keepdims=True)
    var = ((xr - mean) ** 2).mean(axis=-1, keepdims=True)
    gamma = (weight.astype(jnp.float32) + 1.0)[:, None]
    beta = bias.astype(jnp.float32)[:, None]
    out = (xr - mean) / jnp.sqrt(var + eps) * gamma + beta
    return out.reshape(b, c, h, w).astype(x.dtype)


if __name__ == "__main__":
    key = jax.random.PRNGKey(0)
    B, C, H, W = 2, 4, 16, 16
    num_features = C

    kx, kw, kb = jax.random.split(key, 3)
    x = jax.random.normal(kx, (B, C, H, W), dtype=jnp.float32)

    # The module's weight/bias are assigned externally (length B*C); generate
    # them deterministically here.
    weight = jax.random.normal(kw, (B * C,), dtype=jnp.float32) * 0.1
    bias = jax.random.normal(kb, (B * C,), dtype=jnp.float32) * 0.1

    # Buffers from __init__ (unused by the forward output in training mode).
    running_mean = jnp.zeros((num_features,), dtype=jnp.float32)
    running_var = jnp.ones((num_features,), dtype=jnp.float32)
    # TODO(synk): running_mean/running_var momentum update is a training-time
    # side effect that does not affect the forward output; not implemented.

    out = adaptive_instance_norm_2d(x, weight, bias, eps=1e-5)
    out = jax.block_until_ready(out)

    ref = _reference_adain(x, weight, bias, eps=1e-5)
    assert out.shape == (B, C, H, W)
    assert jnp.allclose(out, ref, atol=1e-4, rtol=1e-4), "mismatch vs reference"

    print("KERNEL_OK")
</pallas_src>

<mosaic_0001>
module attributes {stable_mosaic.version = 11 : i64} {
  func.func @_adain_kernel(%arg0: i32, %arg1: memref<8x256xf32, #tpu.memory_space<vmem>>, %arg2: memref<8x1xf32, #tpu.memory_space<vmem>>, %arg3: memref<8x1xf32, #tpu.memory_space<vmem>>, %arg4: memref<8x256xf32, #tpu.memory_space<vmem>>) attributes {dimension_semantics = [#tpu.dimension_semantics<parallel>], iteration_bounds = array<i64: 1>, scalar_prefetch = 0 : i64, scratch_operands = 0 : i64, tpu.core_type = #tpu.core_type<tc>, window_params = [{transform_indices = @transform_0, window_bounds = array<i64: 8, 256>}, {transform_indices = @transform_1, window_bounds = array<i64: 8, 1>}, {transform_indices = @transform_2, window_bounds = array<i64: 8, 1>}, {transform_indices = @transform_3, window_bounds = array<i64: 8, 256>}]} {
    %c0 = arith.constant 0 : index
    %c0_0 = arith.constant 0 : index
    %0 = vector.load %arg1[%c0, %c0_0] : memref<8x256xf32, #tpu.memory_space<vmem>>, vector<8x256xf32>
    %cst = arith.constant dense<0.000000e+00> : vector<8xf32>
    %1 = vector.multi_reduction <add>, %0, %cst [1] : vector<8x256xf32> to vector<8xf32>
    %2 = vector.shape_cast %1 : vector<8xf32> to vector<8x1xf32>
    %cst_1 = arith.constant 2.560000e+02 : f32
    %3 = vector.broadcast %cst_1 : f32 to vector<8x1xf32>
    %4 = arith.divf %2, %3 : vector<8x1xf32>
    %5 = vector.broadcast %4 : vector<8x1xf32> to vector<8x256xf32>
    %6 = arith.subf %0, %5 : vector<8x256xf32>
    %7 = arith.mulf %6, %6 : vector<8x256xf32>
    %cst_2 = arith.constant dense<0.000000e+00> : vector<8xf32>
    %8 = vector.multi_reduction <add>, %7, %cst_2 [1] : vector<8x256xf32> to vector<8xf32>
    %9 = vector.shape_cast %8 : vector<8xf32> to vector<8x1xf32>
    %cst_3 = arith.constant 2.560000e+02 : f32
    %10 = vector.broadcast %cst_3 : f32 to vector<8x1xf32>
    %11 = arith.divf %9, %10 : vector<8x1xf32>
    %cst_4 = arith.constant 9.99999974E-6 : f32
    %12 = vector.broadcast %cst_4 : f32 to vector<8x1xf32>
    %13 = arith.addf %11, %12 : vector<8x1xf32>
    %14 = math.rsqrt %13 : vector<8x1xf32>
    %c0_5 = arith.constant 0 : index
    %c0_6 = arith.constant 0 : index
    %15 = vector.load %arg2[%c0_5, %c0_6] : memref<8x1xf32, #tpu.memory_space<vmem>>, vector<8x1xf32>
    %cst_7 = arith.constant 1.000000e+00 : f32
    %16 = vector.broadcast %cst_7 : f32 to vector<8x1xf32>
    %17 = arith.addf %15, %16 : vector<8x1xf32>
    %18 = arith.mulf %17, %14 : vector<8x1xf32>
    %c0_8 = arith.constant 0 : index
    %c0_9 = arith.constant 0 : index
    %19 = vector.load %arg3[%c0_8, %c0_9] : memref<8x1xf32, #tpu.memory_space<vmem>>, vector<8x1xf32>
    %20 = vector.broadcast %18 : vector<8x1xf32> to vector<8x256xf32>
    %21 = arith.mulf %6, %20 : vector<8x256xf32>
    %22 = vector.broadcast %19 : vector<8x1xf32> to vector<8x256xf32>
    %23 = arith.addf %21, %22 : vector<8x256xf32>
    %c0_10 = arith.constant 0 : index
    %c0_11 = arith.constant 0 : index
    %24 = vector.load %arg4[%c0_10, %c0_11] : memref<8x256xf32, #tpu.memory_space<vmem>>, vector<8x256xf32>
    tpu.vector_store %arg4[%c0_10, %c0_11], %23 {strides = array<i32>} : memref<8x256xf32, #tpu.memory_space<vmem>>, vector<8x256xf32>,
    return
  }
  func.func @transform_0(%arg0: i32) -> (i32, i32) {
    %c0_i32 = arith.constant 0 : i32
    %c0_i32_0 = arith.constant 0 : i32
    return %arg0, %c0_i32 : i32, i32
  }
  func.func @transform_1(%arg0: i32) -> (i32, i32) {
    %c0_i32 = arith.constant 0 : i32
    %c0_i32_0 = arith.constant 0 : i32
    return %arg0, %c0_i32 : i32, i32
  }
  func.func @transform_2(%arg0: i32) -> (i32, i32) {
    %c0_i32 = arith.constant 0 : i32
    %c0_i32_0 = arith.constant 0 : i32
    return %arg0, %c0_i32 : i32, i32
  }
  func.func @transform_3(%arg0: i32) -> (i32, i32) {
    %c0_i32 = arith.constant 0 : i32
    %c0_i32_0 = arith.constant 0 : i32
    return %arg0, %c0_i32 : i32, i32
  }
}

</mosaic_0001>

<llo_original>
// kernel: tpu_custom_call.1
$region0: #{tpu_custom_call.1}
  #allocation0 [shape = 'u32[]', space=smem, size = 0x4, offset = 0x4, fixed_abs, tag = 'smem constant byte address 0x4 - core index']
  #allocation1 [shape = 'u32[144,128]{1,0:T(1,128)}', space=vmem, size = 0x12000, scoped, tag = 'internal scratch']
  %s0 = inlined_call_operand.vmem [shape: f32[8,256], index: 0, kind: input, shape index: {}]
  %s1 = inlined_call_operand.vmem [shape: f32[8,1], index: 1, kind: input, shape index: {}]
  %s2 = inlined_call_operand.vmem [shape: f32[8,1], index: 2, kind: input, shape index: {}]
  %s3 = inlined_call_operand.hbm [shape: f32[8,256], index: 3, kind: output, shape index: {}]
  %s4 = sld [smem:[#allocation0]]
  $region22: #{tpu_custom_call.1} parent=0
    _
  %s6 = ssub.s32 1, %s4
  %s7 = scalar_select 0, %s6, %s4
  $region1: #{tpu_custom_call.1} parent=0
    #allocation2 [shape = 'u8[8192]{0}', space=vmem, size = 0x2000, scoped, tag = 'output window, operand 0, single buffered']
    #allocation3 [shape = 's32[1]{0}', space=sflag, size = 0x4, scoped, tag = 'scoped memory for tpu_custom_call.1']
    %8 = vsyncpa [#allocation3], 0
    // Predicated region
    $region2: #{tpu_custom_call.1} parent=1 // pred_check
      _
    $region3: #{tpu_custom_call.1} parent=1 // pred_check_branch
      %10 = sbr.rel (0) target = $region5
    $region4: #{tpu_custom_call.1} parent=1 // pred_region
      _
    $region5: #{tpu_custom_call.1} parent=1 // pred_fallthru
      _
    // Predicated region
    $region6: #{tpu_custom_call.1} parent=1 // pred_check
      _
    $region7: #{tpu_custom_call.1} parent=1 // pred_check_branch
      %12 = sbr.rel (0) target = $region9
    $region8: #{tpu_custom_call.1} parent=1 // pred_region
      _
    $region9: #{tpu_custom_call.1} parent=1 // pred_fallthru
      _
    // Predicated region
    $region10: #{tpu_custom_call.1} parent=1 // pred_check
      _
    $region11: #{tpu_custom_call.1} parent=1 // pred_check_branch
      %14 = sbr.rel (0) target = $region13
    $region12: #{tpu_custom_call.1} parent=1 // pred_region
      _
    $region13: #{tpu_custom_call.1} parent=1 // pred_fallthru
      _
    %v15 = vld [vmem:[%s0] sm:$0xff]
    %v16 = vld [vmem:[%s0 + $0x8] sm:$0xff]
    %v17 = vadd.f32 %v15, %v16
    %18 = vadd.xlane.f32.xlu0 %v17
    %v19 = vpop.xlane.xlu0 %18
    %v20 = vrcp.pop 256.0
    %v21 = vmul.f32 %v19, %v20
    %v22 = vsub.f32 %v15, %v21
    %v23 = vsub.f32 %v16, %v21
    %v24 = vmul.f32 %v22, %v22
    %v25 = vmul.f32 %v23, %v23
    %v26 = vadd.f32 %v24, %v25
    %27 = vadd.xlane.f32.xlu0 %v26
    %v28 = vpop.xlane.xlu0 %27
    %v29 = vmul.f32 %v28, %v20
    %v30 = vadd.f32 %v29, 1e-05
    %v31 = vrsqrt.pop %v30
    %v32 = vld [vmem:[%s1] sm:$0xff]
    %v33 = vadd.f32 %v32, 1.0
    %v34 = vmul.f32 %v33, %v31
    %v35 = vld [vmem:[%s2] sm:$0xff]
    %37 = vset.pattern.permute.xlu0 0
    %38 = vperm.xlu0 %37, %v34
    %v39 = vpop.permute.xlu0 %38
    %v41 = vmul.f32 %v22, %v39
    %v42 = vmul.f32 %v23, %v39
    %44 = vset.pattern.permute.xlu0 0
    %45 = vperm.xlu0 %44, %v35
    %v46 = vpop.permute.xlu0 %45
    %v48 = vadd.f32 %v41, %v46
    %v49 = vadd.f32 %v42, %v46
    %50 = vst [vmem:[#allocation2] sm:$0xff] %v48
    %51 = vst [vmem:[#allocation2 + $0x8] sm:$0xff] %v49
    // Predicated region
    $region14: #{tpu_custom_call.1} parent=1 // pred_check
      _
    $region15: #{tpu_custom_call.1} parent=1 // pred_check_branch
      %53 = sbr.rel (0) target = $region17
    $region16: #{tpu_custom_call.1} parent=1 // pred_region
      %s55 = ssub.s32 256, 256
      %56 = vsyncadd [#allocation3], %s55
      %s58 = sshll.u32 [#allocation2], 4
      %s59 = int_to_ptr.vmem [resolvable:$true] %s58
      %61 = dma.vmem_to_hbm [thread:$0]  %s59, 256, %s3, [#allocation3]
    $region17: #{tpu_custom_call.1} parent=1 // pred_fallthru
      _
    // Predicated region
    $region18: #{tpu_custom_call.1} parent=1 // pred_check
      _
    $region19: #{tpu_custom_call.1} parent=1 // pred_check_branch
      %63 = sbr.rel (0) target = $region21
    $region20: #{tpu_custom_call.1} parent=1 // pred_region
      %64 = dma.done [#allocation3], 256
    $region21: #{tpu_custom_call.1} parent=1 // pred_fallthru
      _
    %65 = vsyncpa [#allocation3], 1

</llo_original>
